<compile_context>
chip_gen: v7x
topology: tpu7x:2x2x1
jax: 0.10.0
libtpu: 0.0.40
codegen_flags: <defaults>
</compile_context>

<pallas_src>
import functools
import math

import jax
import jax.numpy as jnp
from jax.experimental import pallas as pl
from jax.experimental.pallas import tpu as pltpu


def _round_up(x, m):
    return ((x + m - 1) // m) * m


def _embed_kernel(ids_ref, emb_ref, out_ref, acc_ref, *, scale):
    """One (token-tile, vocab-tile) grid step of the gather-as-matmul.

    ids_ref: (TN, 1)  int32  token ids of this token tile (revisited over kv)
    emb_ref: (TV, D)  float  vocab slice [kv*TV, (kv+1)*TV) of the table
    out_ref: (TN, D)  out    output tile (written once, at the last kv step)
    acc_ref: (TN, D)  f32    VMEM accumulator, persists across the kv axis
    """
    kv = pl.program_id(1)

    @pl.when(kv == 0)
    def _init():
        acc_ref[...] = jnp.zeros_like(acc_ref)

    ids = ids_ref[...]                                   # (TN, 1) int32
    tn = ids.shape[0]
    tv = emb_ref.shape[0]

    # one-hot of this vocab slice: onehot[t, v] = (ids[t] == kv*TV + v).
    # Note: out-of-range / negative ids yield an all-zero row (zero embedding),
    # whereas PyTorch nn.Embedding would raise.  Callers must pass valid ids.
    col = jax.lax.broadcasted_iota(jnp.int32, (tn, tv), 1) + kv * tv
    onehot = (ids == col).astype(jnp.float32)            # (TN, TV), exact 0/1

    # MXU matmul; exact f32 gather (one-hot entries are exact 1.0, rest add 0).
    acc_ref[...] += jnp.dot(
        onehot, emb_ref[...].astype(jnp.float32),
        preferred_element_type=jnp.float32)

    @pl.when(kv == pl.num_programs(1) - 1)
    def _finalize():
        # sqrt(d_model) applied once per output tile (hoisted off the per-kv
        # path); NOT pre-scaled in the JAX wrapper (would be an un-hidden op).
        out_ref[...] = (acc_ref[...] * scale).astype(out_ref.dtype)


def input_embeddings_forward(x_ids, emb_table, *, tile_n=512, tile_v=512,
                             out_dtype=None):
    """x_ids: (B, S) int token ids; emb_table: (V, D) -> (B, S, D).

    Computes emb_table[x_ids] * sqrt(D) with a vocab-tiled one-hot matmul.
    For best store bandwidth keep D a multiple of 128 (lane-dense output) and
    consider out_dtype=jnp.bfloat16 if the consumer accepts it.
    """
    B, S = x_ids.shape
    V, D = emb_table.shape
    if out_dtype is None:
        out_dtype = emb_table.dtype
    scale = math.sqrt(D)

    N = B * S
    # Token tiling: large, sublane-aligned tiles; clamp for tiny inputs and pad
    # N up to a multiple of tile_n (padded tokens are sliced off afterwards).
    tile_n = min(tile_n, _round_up(N, 8))
    assert tile_n % 8 == 0
    n_tiles = pl.cdiv(N, tile_n)
    n_pad = n_tiles * tile_n

    # Vocab tiling: the table is streamed in (tile_v, D) slices, so VMEM use is
    # bounded by the tile sizes and independent of vocab size.
    tile_v = min(tile_v, _round_up(V, 8))
    assert tile_v % 8 == 0
    v_tiles = pl.cdiv(V, tile_v)
    v_pad = v_tiles * tile_v

    ids_flat = x_ids.reshape(N).astype(jnp.int32)
    if n_pad != N:
        ids_flat = jnp.pad(ids_flat, (0, n_pad - N))
    ids_col = ids_flat.reshape(n_pad, 1)

    emb = emb_table
    if v_pad != V:
        # zero rows; never selected by valid ids (< V)
        emb = jnp.pad(emb, ((0, v_pad - V), (0, 0)))

    emb_itemsize = jnp.dtype(emb_table.dtype).itemsize
    out_itemsize = jnp.dtype(out_dtype).itemsize

    # Rough per-step VMEM budget: double-buffered ids/table/out blocks + the f32
    # accumulator.  Only raise the scoped limit when the ~32 MiB default would
    # not fit (keeps defaults safe on v7x's 64 MiB physical VMEM).
    vmem_bytes = (2 * tile_n * 512                       # (TN,1) i32 block, lane-padded
                  + 2 * tile_v * D * emb_itemsize        # table slice, double-buffered
                  + 2 * tile_n * D * out_itemsize        # output tile, double-buffered
                  + tile_n * D * 4)                      # accumulator scratch
    vmem_limit = None
    if vmem_bytes > 30 * 1024 * 1024:
        vmem_limit = min(int(vmem_bytes * 5 // 4), 100 * 1024 * 1024)

    cost = pl.CostEstimate(
        flops=2 * n_pad * v_pad * D,
        transcendentals=0,
        bytes_accessed=(n_pad * 4
                        + n_tiles * v_pad * D * emb_itemsize
                        + n_pad * D * out_itemsize),
    )

    kernel = functools.partial(_embed_kernel, scale=scale)

    out_flat = pl.pallas_call(
        kernel,
        out_shape=jax.ShapeDtypeStruct((n_pad, D), out_dtype),
        grid_spec=pltpu.PrefetchScalarGridSpec(
            num_scalar_prefetch=0,
            grid=(n_tiles, v_tiles),
            in_specs=[
                # token-id tile: constant block index across kv -> revisited,
                # DMA'd once per token tile, not once per grid step.
                pl.BlockSpec((tile_n, 1), lambda i, kv: (i, 0)),
                # vocab slice of the table: streamed / double-buffered over kv.
                pl.BlockSpec((tile_v, D), lambda i, kv: (kv, 0)),
            ],
            out_specs=pl.BlockSpec((tile_n, D), lambda i, kv: (i, 0)),
            scratch_shapes=[pltpu.VMEM((tile_n, D), jnp.float32)],
        ),
        compiler_params=pltpu.CompilerParams(
            dimension_semantics=("parallel", "arbitrary"),
            vmem_limit_bytes=vmem_limit,
        ),
        cost_estimate=cost,
    )(ids_col, emb)

    return out_flat[:N].reshape(B, S, D)


if __name__ == "__main__":
    # small-but-lane-dense shapes: batch=2, seq=100, d_model=128, vocab=1000
    # (d_model multiple of 128 for unmasked output stores; vocab exercises the
    #  vocab-tiling / padding path: 1000 -> 2 tiles of 512).
    B, S, D, V = 2, 100, 128, 1000

    key = jax.random.PRNGKey(0)
    k_emb, k_ids = jax.random.split(key)

    # nn.Embedding default init: N(0, 1)
    emb_table = jax.random.normal(k_emb, (V, D), dtype=jnp.float32)
    x_ids = jax.random.randint(k_ids, (B, S), 0, V, dtype=jnp.int32)

    out = input_embeddings_forward(x_ids, emb_table)
    out = jax.block_until_ready(out)

    # correctness check against plain-JAX reference
    ref = emb_table[x_ids] * math.sqrt(D)
    assert out.shape == (B, S, D)
    assert jnp.allclose(out, ref, atol=1e-5, rtol=1e-5), "mismatch vs reference"

    print("KERNEL_OK")
</pallas_src>

<mosaic_0001>
module attributes {stable_mosaic.version = 11 : i64} {
  func.func @_embed_kernel(%arg0: i32, %arg1: i32, %arg2: memref<200x1xi32, #tpu.memory_space<vmem>>, %arg3: memref<512x128xf32, #tpu.memory_space<vmem>>, %arg4: memref<200x128xf32, #tpu.memory_space<vmem>>, %arg5: memref<200x128xf32, #tpu.memory_space<vmem>>) attributes {dimension_semantics = [#tpu.dimension_semantics<parallel>, #tpu.dimension_semantics<arbitrary>], iteration_bounds = array<i64: 1, 2>, scalar_prefetch = 0 : i64, scratch_operands = 1 : i64, tpu.core_type = #tpu.core_type<tc>, window_params = [{transform_indices = @transform_0, window_bounds = array<i64: 200, 1>}, {transform_indices = @transform_1, window_bounds = array<i64: 512, 128>}, {transform_indices = @transform_2, window_bounds = array<i64: 200, 128>}]} {
    %c0_i32 = arith.constant 0 : i32
    %0 = arith.cmpi eq, %arg1, %c0_i32 : i32
    %1 = arith.extui %0 : i1 to i32
    %c0_i32_0 = arith.constant 0 : i32
    %2 = arith.cmpi ne, %1, %c0_i32_0 : i32
    scf.if %2 {
      %cst_9 = arith.constant 0.000000e+00 : f32
      %20 = vector.broadcast %cst_9 : f32 to vector<200x128xf32>
      %c0_10 = arith.constant 0 : index
      %c0_11 = arith.constant 0 : index
      %21 = vector.load %arg5[%c0_10, %c0_11] : memref<200x128xf32, #tpu.memory_space<vmem>>, vector<200x128xf32>
      tpu.vector_store %arg5[%c0_10, %c0_11], %20 {strides = array<i32>} : memref<200x128xf32, #tpu.memory_space<vmem>>, vector<200x128xf32>,
    } else {
    }
    %c0 = arith.constant 0 : index
    %c0_1 = arith.constant 0 : index
    %3 = vector.load %arg2[%c0, %c0_1] : memref<200x1xi32, #tpu.memory_space<vmem>>, vector<200x1xi32>
    %4 = tpu.iota {dimensions = array<i32: 1>} : vector<200x512xi32>
    %c512_i32 = arith.constant 512 : i32
    %5 = arith.muli %arg1, %c512_i32 : i32
    %6 = vector.broadcast %5 : i32 to vector<200x512xi32>
    %7 = arith.addi %4, %6 : vector<200x512xi32>
    %8 = vector.broadcast %3 : vector<200x1xi32> to vector<200x512xi32>
    %9 = arith.cmpi eq, %8, %7 : vector<200x512xi32>
    %10 = arith.extui %9 : vector<200x512xi1> to vector<200x512xi32>
    %11 = arith.sitofp %10 : vector<200x512xi32> to vector<200x512xf32>
    %c0_2 = arith.constant 0 : index
    %c0_3 = arith.constant 0 : index
    %12 = vector.load %arg5[%c0_2, %c0_3] : memref<200x128xf32, #tpu.memory_space<vmem>>, vector<200x128xf32>
    %c0_4 = arith.constant 0 : index
    %c0_5 = arith.constant 0 : index
    %13 = vector.load %arg3[%c0_4, %c0_5] : memref<512x128xf32, #tpu.memory_space<vmem>>, vector<512x128xf32>
    %cst = arith.constant dense<0.000000e+00> : vector<200x128xf32>
    %14 = tpu.matmul %11, %13, %cst {dimension_numbers = #tpu.dot_dimension_numbers<[1], [0], [0], [1], [0, 0, 1, 1], [], []>} : vector<200x512xf32>, vector<512x128xf32>, vector<200x128xf32> -> vector<200x128xf32>
    %15 = arith.addf %12, %14 : vector<200x128xf32>
    %c0_6 = arith.constant 0 : index
    %c0_7 = arith.constant 0 : index
    %16 = vector.load %arg5[%c0_6, %c0_7] : memref<200x128xf32, #tpu.memory_space<vmem>>, vector<200x128xf32>
    tpu.vector_store %arg5[%c0_6, %c0_7], %15 {strides = array<i32>} : memref<200x128xf32, #tpu.memory_space<vmem>>, vector<200x128xf32>,
    %c1_i32 = arith.constant 1 : i32
    %17 = arith.cmpi eq, %arg1, %c1_i32 : i32
    %18 = arith.extui %17 : i1 to i32
    %c0_i32_8 = arith.constant 0 : i32
    %19 = arith.cmpi ne, %18, %c0_i32_8 : i32
    scf.if %19 {
      %c0_9 = arith.constant 0 : index
      %c0_10 = arith.constant 0 : index
      %20 = vector.load %arg5[%c0_9, %c0_10] : memref<200x128xf32, #tpu.memory_space<vmem>>, vector<200x128xf32>
      %cst_11 = arith.constant 11.3137083 : f32
      %21 = vector.broadcast %cst_11 : f32 to vector<200x128xf32>
      %22 = arith.mulf %20, %21 : vector<200x128xf32>
      %c0_12 = arith.constant 0 : index
      %c0_13 = arith.constant 0 : index
      %23 = vector.load %arg4[%c0_12, %c0_13] : memref<200x128xf32, #tpu.memory_space<vmem>>, vector<200x128xf32>
      tpu.vector_store %arg4[%c0_12, %c0_13], %22 {strides = array<i32>} : memref<200x128xf32, #tpu.memory_space<vmem>>, vector<200x128xf32>,
    } else {
    }
    return
  }
  func.func @transform_0(%arg0: i32, %arg1: i32) -> (i32, i32) {
    %c0_i32 = arith.constant 0 : i32
    %c0_i32_0 = arith.constant 0 : i32
    return %arg0, %c0_i32 : i32, i32
  }
  func.func @transform_1(%arg0: i32, %arg1: i32) -> (i32, i32) {
    %c0_i32 = arith.constant 0 : i32
    %c0_i32_0 = arith.constant 0 : i32
    return %arg1, %c0_i32 : i32, i32
  }
  func.func @transform_2(%arg0: i32, %arg1: i32) -> (i32, i32) {
    %c0_i32 = arith.constant 0 : i32
    %c0_i32_0 = arith.constant 0 : i32
    return %arg0, %c0_i32 : i32, i32
  }
}

</mosaic_0001>

<llo_original>
// kernel: tpu_custom_call.1
$region0: #{tpu_custom_call.1}
  #allocation0 [shape = 'u32[]', space=smem, size = 0x4, offset = 0x4, fixed_abs, tag = 'smem constant byte address 0x4 - core index']
  #allocation1 [shape = 'u32[144,128]{1,0:T(1,128)}', space=vmem, size = 0x12000, scoped, tag = 'internal scratch']
  #allocation2 [shape = 'f32[200,128]{1,0:T(8,128)}', space=vmem, size = 0x19000, scoped, tag = 'scratch operand']
  %s0 = inlined_call_operand.vmem [shape: s32[200,1], index: 0, kind: input, shape index: {}]
  %s1 = inlined_call_operand.hbm [shape: f32[1024,128], index: 1, kind: input, shape index: {}]
  %s2 = inlined_call_operand.hbm [shape: f32[200,128], index: 2, kind: output, shape index: {}]
  %s3 = sld [smem:[#allocation0]]
  $region53: #{tpu_custom_call.1} parent=0
    _
  %s5 = ssub.s32 1, %s3
  %s6 = scalar_select 0, %s5, %s3
  $region1: #{tpu_custom_call.1} parent=0
    #allocation3 [shape = 'u8[524288]{0}', space=vmem, size = 0x80000, scoped, tag = 'input window, operand 1']
    #allocation4 [shape = 's32[2]{0}', space=sflag, size = 0x8, scoped, tag = 'scoped memory for tpu_custom_call.1']
    #allocation5 [shape = 's32[2]{0}', space=sflag, size = 0x8, scoped, tag = 'scoped memory for tpu_custom_call.1']
    #allocation6 [shape = 'u8[102400]{0}', space=vmem, size = 0x19000, scoped, tag = 'output window, operand 0, single buffered']
    %7 = vsyncpa [#allocation4], 0
    %s8 = scalar_lea.sflag [#allocation4], 1
    %9 = vsyncpa %s8, 0
    %10 = vsyncpa [#allocation5], 0
    loop: start=0, step=1, limit=4
    $region2: #{tpu_custom_call.1} parent=1 // loop_pre_header
      _
    $region3: #{tpu_custom_call.1} parent=1 // loop_header
      %s12 = sphi 0, %s16
      %p13 = scmp.ge.s32.totalorder %s12, 4
      %s19 = sphi 0, %s31
      %s20 = sphi 0, %s27
      %s21 = sphi 0, %s19
      %s22 = sphi 0, %s20
      %s23 = sphi 0, %s21
      %s24 = sphi 0, %s22
      %s34 = sphi 0, %s36
      %s37 = sphi 0, %s34
      %s38 = sphi 0, %s37
      %s54 = sphi 0, %s38
      %s60 = sphi 0, %s62
      %s63 = sphi 0, %s60
      %s64 = sphi 0, %s63
      %s80 = sphi 0, %s64
      %s86 = sphi 0, %s88
      %s89 = sphi 0, %s86
      %s90 = sphi 0, %s89
      %s106 = sphi 0, %s90
    $region4: #{tpu_custom_call.1} parent=1 // loop_header_branch
      %15 = sbr.rel (%p13) target = $region8
    $region5: #{tpu_custom_call.1} parent=1 // loop_body
      %s17 = ssub.s32 %s12, 1
      %s18 = ssub.s32 %s12, 2
      %s25 = sadd.s32 1, %s20
      %p26 = scmp.ge.s32.totalorder %s25, 2
      %s27 = scalar_select %p26, 0, %s25
      %s28 = sadd.s32 1, %s19
      %s29 = scalar_select %p26, %s28, %s19
      %p30 = scmp.ge.s32.totalorder %s29, 1
      %s31 = scalar_select %p30, 0, %s29
      %s32 = ssub.s32 %s19, %s31
      %p33 = scmp.eq.s32.totalorder %s32, 0
      %s35 = sadd.s32 %s34, 1
      %s36 = scalar_select %p33, %s34, %s35
      %p39 = pneg %p33
      %p40 = scmp.eq.s32.totalorder %s12, 1
      %p41 = por %p39, %p40
      %p42 = scmp.ne.s32.totalorder %s34, %s37
      %p43 = scmp.eq.s32.totalorder %s12, 0
      %p44 = por %p42, %p43
      %p45 = scmp.ne.s32.totalorder %s34, %s37
      %p46 = scmp.eq.s32.totalorder %s17, 1
      %p47 = por %p45, %p46
      %p48 = scmp.ne.s32.totalorder %s37, %s38
      %p49 = scmp.eq.s32.totalorder %s17, 0
      %p50 = por %p48, %p49
      %p51 = scmp.ne.s32.totalorder %s37, %s38
      %p52 = scmp.eq.s32.totalorder %s18, 1
      %p53 = por %p51, %p52
      %p55 = scmp.ne.s32.totalorder %s38, %s54
      %p56 = scmp.eq.s32.totalorder %s18, 0
      %p57 = por %p55, %p56
      %s58 = ssub.s32 %s20, %s27
      %p59 = scmp.eq.s32.totalorder %s58, 0
      %s61 = sadd.s32 %s60, 1
      %s62 = scalar_select %p59, %s60, %s61
      %p65 = pneg %p59
      %p66 = scmp.eq.s32.totalorder %s12, 1
      %p67 = por %p65, %p66
      %p68 = scmp.ne.s32.totalorder %s60, %s63
      %p69 = scmp.eq.s32.totalorder %s12, 0
      %p70 = por %p68, %p69
      %p71 = scmp.ne.s32.totalorder %s60, %s63
      %p72 = scmp.eq.s32.totalorder %s17, 1
      %p73 = por %p71, %p72
      %p74 = scmp.ne.s32.totalorder %s63, %s64
      %p75 = scmp.eq.s32.totalorder %s17, 0
      %p76 = por %p74, %p75
      %p77 = scmp.ne.s32.totalorder %s63, %s64
      %p78 = scmp.eq.s32.totalorder %s18, 1
      %p79 = por %p77, %p78
      %p81 = scmp.ne.s32.totalorder %s64, %s80
      %p82 = scmp.eq.s32.totalorder %s18, 0
      %p83 = por %p81, %p82
      %s84 = ssub.s32 %s19, %s31
      %p85 = scmp.eq.s32.totalorder %s84, 0
      %s87 = sadd.s32 %s86, 1
      %s88 = scalar_select %p85, %s86, %s87
      %p91 = pneg %p85
      %p92 = scmp.eq.s32.totalorder %s12, 1
      %p93 = por %p91, %p92
      %p94 = scmp.ne.s32.totalorder %s86, %s89
      %p95 = scmp.eq.s32.totalorder %s12, 0
      %p96 = por %p94, %p95
      %p97 = scmp.ne.s32.totalorder %s86, %s89
      %p98 = scmp.eq.s32.totalorder %s17, 1
      %p99 = por %p97, %p98
      %p100 = scmp.ne.s32.totalorder %s89, %s90
      %p101 = scmp.eq.s32.totalorder %s17, 0
      %p102 = por %p100, %p101
      %p103 = scmp.ne.s32.totalorder %s89, %s90
      %p104 = scmp.eq.s32.totalorder %s18, 1
      %p105 = por %p103, %p104
      %p107 = scmp.ne.s32.totalorder %s90, %s106
      %p108 = scmp.eq.s32.totalorder %s18, 0
      %p109 = por %p107, %p108
      %p110 = scmp.le.s32.totalorder 1, %s12
      %p111 = scmp.lt.s32.totalorder %s12, 3
      %p112 = pnand %p110, %p111
      %p113 = pneg %p112
      // Predicated region
      $region9: #{tpu_custom_call.1} parent=5 // pred_check
        _
      $region10: #{tpu_custom_call.1} parent=5 // pred_check_branch
        %115 = sbr.rel (%p112) target = $region12
      $region11: #{tpu_custom_call.1} parent=5 // pred_region
        %s116 = ssub.s32 %s12, 1
        // Predicated region
        $region13: #{tpu_custom_call.1} parent=11 // pred_check
          %p117 = pneg %p50
        $region14: #{tpu_custom_call.1} parent=11 // pred_check_branch
          %119 = sbr.rel (%p117) target = $region16
        $region15: #{tpu_custom_call.1} parent=11 // pred_region
          %s120 = smul.u32 25, %s21
          %p121 = scmp.lt.s32.totalorder %s120, 24
          %s122 = scalar_select %p121, %s120, 24
          %s123 = smul.addr %s122, 8
          %s124 = scalar_lea.vmem %s0, %s123
          %s125 = smul.u32 25, %s21
        $region16: #{tpu_custom_call.1} parent=11 // pred_fallthru
          _
      $region12: #{tpu_custom_call.1} parent=5 // pred_fallthru
        _
      %p126 = scmp.lt.s32.totalorder %s12, 2
      // Predicated region
      $region17: #{tpu_custom_call.1} parent=5 // pred_check
        %p127 = pneg %p126
      $region18: #{tpu_custom_call.1} parent=5 // pred_check_branch
        %129 = sbr.rel (%p127) target = $region20
      $region19: #{tpu_custom_call.1} parent=5 // pred_region
        // Predicated region
        $region21: #{tpu_custom_call.1} parent=19 // pred_check
          %p130 = pneg %p70
        $region22: #{tpu_custom_call.1} parent=19 // pred_check_branch
          %132 = sbr.rel (%p130) target = $region24
        $region23: #{tpu_custom_call.1} parent=19 // pred_region
          %s133 = sand.u32 %s60, 1
          %s134 = scalar_lea.sflag [#allocation4], %s133
          %s135 = sand.u32 %s60, 1
          %s136 = smul.addr %s135, 512
          %s137 = scalar_lea.vmem [#allocation3], %s136
          %s138 = smul.u32 64, %s20
          %s140 = ssub.s32 8192, 8192
          %141 = vsyncadd %s134, %s140
          %s142 = smul.addr %s138, 128
          %s143 = scalar_lea.hbm %s1, %s142
          %s144 = sshll.u32 %s137, 4
          %s145 = int_to_ptr.vmem [resolvable:$true] %s144
          %150 = dma.hbm_to_vmem [thread:$0]  %s143, 8192, %s145, %s134, 128, 128, 8
        $region24: #{tpu_custom_call.1} parent=19 // pred_fallthru
          _
      $region20: #{tpu_custom_call.1} parent=5 // pred_fallthru
        _
      %p151 = scmp.le.s32.totalorder 1, %s12
      %p152 = scmp.lt.s32.totalorder %s12, 3
      %p153 = pnand %p151, %p152
      %p154 = pneg %p153
      // Predicated region
      $region25: #{tpu_custom_call.1} parent=5 // pred_check
        _
      $region26: #{tpu_custom_call.1} parent=5 // pred_check_branch
        %156 = sbr.rel (%p153) target = $region28
      $region27: #{tpu_custom_call.1} parent=5 // pred_region
        %s157 = ssub.s32 %s12, 1
        %s158 = sand.u32 %s63, 1
        %s159 = scalar_lea.sflag [#allocation4], %s158
        %s160 = sand.u32 %s63, 1
        %s161 = smul.addr %s160, 512
        %s162 = scalar_lea.vmem [#allocation3], %s161
        // Predicated region
        $region29: #{tpu_custom_call.1} parent=27 // pred_check
          %p163 = pneg %p76
        $region30: #{tpu_custom_call.1} parent=27 // pred_check_branch
          %165 = sbr.rel (%p163) target = $region32
        $region31: #{tpu_custom_call.1} parent=27 // pred_region
          %166 = dma.done %s159, 8192
        $region32: #{tpu_custom_call.1} parent=27 // pred_fallthru
          _
        %s167 = smul.u32 25, %s21
        %p168 = scmp.lt.s32.totalorder %s167, 24
        %s169 = scalar_select %p168, %s167, 24
        %s170 = smul.addr %s169, 8
        %s171 = scalar_lea.vmem %s0, %s170
        %p172 = pneg %p50
        %p173 = pneg %p47
        %s174 = sand.u32 %s63, 1
        %s175 = scalar_lea.sflag [#allocation4], %s174
        %s176 = sand.u32 %s63, 1
        %s177 = smul.addr %s176, 512
        %s178 = scalar_lea.vmem [#allocation3], %s177
        %p179 = pneg %p76
        %p180 = pneg %p73
        %p181 = pneg %p102
        %p182 = pneg %p99
        %s183 = smul.u32 25, %s21
        %p184 = scmp.lt.s32.totalorder %s183, 24
        %s185 = scalar_select %p184, %s183, 24
        %s186 = smul.addr %s185, 8
        %s187 = scalar_lea.vmem %s0, %s186
        %s188 = smul.u32 25, %s21
        %s189 = smul.u32 64, %s22
        %s190 = smul.u32 25, %s21
        %p191 = scmp.eq.s32.totalorder %s22, 0
        // Predicated region
        $region33: #{tpu_custom_call.1} parent=27 // pred_check
          %p192 = pneg %p191
        $region34: #{tpu_custom_call.1} parent=27 // pred_check_branch
          %194 = sbr.rel (%p192) target = $region36
        $region35: #{tpu_custom_call.1} parent=27 // pred_region
          %195 = vst [vmem:[#allocation2] sm:$0xff] 0.0
          %196 = vst [vmem:[#allocation2 + $0x8] sm:$0xff] 0.0
          %197 = vst [vmem:[#allocation2 + $0x10] sm:$0xff] 0.0
          %198 = vst [vmem:[#allocation2 + $0x18] sm:$0xff] 0.0
          %199 = vst [vmem:[#allocation2 + $0x20] sm:$0xff] 0.0
          %200 = vst [vmem:[#allocation2 + $0x28] sm:$0xff] 0.0
          %201 = vst [vmem:[#allocation2 + $0x30] sm:$0xff] 0.0
          %202 = vst [vmem:[#allocation2 + $0x38] sm:$0xff] 0.0
          %203 = vst [vmem:[#allocation2 + $0x40] sm:$0xff] 0.0
          %204 = vst [vmem:[#allocation2 + $0x48] sm:$0xff] 0.0
          %205 = vst [vmem:[#allocation2 + $0x50] sm:$0xff] 0.0
          %206 = vst [vmem:[#allocation2 + $0x58] sm:$0xff] 0.0
          %207 = vst [vmem:[#allocation2 + $0x60] sm:$0xff] 0.0
          %208 = vst [vmem:[#allocation2 + $0x68] sm:$0xff] 0.0
          %209 = vst [vmem:[#allocation2 + $0x70] sm:$0xff] 0.0
          %210 = vst [vmem:[#allocation2 + $0x78] sm:$0xff] 0.0
          %211 = vst [vmem:[#allocation2 + $0x80] sm:$0xff] 0.0
          %212 = vst [vmem:[#allocation2 + $0x88] sm:$0xff] 0.0
          %213 = vst [vmem:[#allocation2 + $0x90] sm:$0xff] 0.0
          %214 = vst [vmem:[#allocation2 + $0x98] sm:$0xff] 0.0
          %215 = vst [vmem:[#allocation2 + $0xa0] sm:$0xff] 0.0
          %216 = vst [vmem:[#allocation2 + $0xa8] sm:$0xff] 0.0
          %217 = vst [vmem:[#allocation2 + $0xb0] sm:$0xff] 0.0
          %218 = vst [vmem:[#allocation2 + $0xb8] sm:$0xff] 0.0
          %219 = vst [vmem:[#allocation2 + $0xc0] sm:$0xff] 0.0
        $region36: #{tpu_custom_call.1} parent=27 // pred_fallthru
          _
        %v220 = vld [vmem:[%s187] sm:$0xff]
        %v221 = vld [vmem:[%s187 + $0x8] sm:$0xff]
        %v222 = vld [vmem:[%s187 + $0x10] sm:$0xff]
        %v223 = vld [vmem:[%s187 + $0x18] sm:$0xff]
        %v224 = vld [vmem:[%s187 + $0x20] sm:$0xff]
        %v225 = vld [vmem:[%s187 + $0x28] sm:$0xff]
        %v226 = vld [vmem:[%s187 + $0x30] sm:$0xff]
        %v227 = vld [vmem:[%s187 + $0x38] sm:$0xff]
        %v228 = vld [vmem:[%s187 + $0x40] sm:$0xff]
        %v229 = vld [vmem:[%s187 + $0x48] sm:$0xff]
        %v230 = vld [vmem:[%s187 + $0x50] sm:$0xff]
        %v231 = vld [vmem:[%s187 + $0x58] sm:$0xff]
        %v232 = vld [vmem:[%s187 + $0x60] sm:$0xff]
        %v233 = vld [vmem:[%s187 + $0x68] sm:$0xff]
        %v234 = vld [vmem:[%s187 + $0x70] sm:$0xff]
        %v235 = vld [vmem:[%s187 + $0x78] sm:$0xff]
        %v236 = vld [vmem:[%s187 + $0x80] sm:$0xff]
        %v237 = vld [vmem:[%s187 + $0x88] sm:$0xff]
        %v238 = vld [vmem:[%s187 + $0x90] sm:$0xff]
        %v239 = vld [vmem:[%s187 + $0x98] sm:$0xff]
        %v240 = vld [vmem:[%s187 + $0xa0] sm:$0xff]
        %v241 = vld [vmem:[%s187 + $0xa8] sm:$0xff]
        %v242 = vld [vmem:[%s187 + $0xb0] sm:$0xff]
        %v243 = vld [vmem:[%s187 + $0xb8] sm:$0xff]
        %v244 = vld [vmem:[%s187 + $0xc0] sm:$0xff]
        %v245 = vlaneseq
        %v246 = vand.u32 %v245, 127
        %v247 = vadd.s32 %v246, 128
        %v248 = vadd.s32 %v246, 256
        %v249 = vadd.s32 %v246, 384
        %s250 = smul.u32 %s22, 512
        %v251 = vstv %s250
        %v252 = vadd.s32 %v246, %v251
        %v253 = vadd.s32 %v247, %v251
        %v254 = vadd.s32 %v248, %v251
        %v255 = vadd.s32 %v249, %v251
        %256 = vset.pattern.permute.xlu0 0
        %257 = vperm.xlu0 %256, %v220
        %v258 = vpop.permute.xlu0 %257
        %259 = vset.pattern.permute.xlu0 0
        %260 = vperm.xlu0 %259, %v221
        %v261 = vpop.permute.xlu0 %260
        %262 = vset.pattern.permute.xlu0 0
        %263 = vperm.xlu0 %262, %v222
        %v264 = vpop.permute.xlu0 %263
        %265 = vset.pattern.permute.xlu0 0
        %266 = vperm.xlu0 %265, %v223
        %v267 = vpop.permute.xlu0 %266
        %268 = vset.pattern.permute.xlu0 0
        %269 = vperm.xlu0 %268, %v224
        %v270 = vpop.permute.xlu0 %269
        %271 = vset.pattern.permute.xlu0 0
        %272 = vperm.xlu0 %271, %v225
        %v273 = vpop.permute.xlu0 %272
        %274 = vset.pattern.permute.xlu0 0
        %275 = vperm.xlu0 %274, %v226
        %v276 = vpop.permute.xlu0 %275
        %277 = vset.pattern.permute.xlu0 0
        %278 = vperm.xlu0 %277, %v227
        %v279 = vpop.permute.xlu0 %278
        %280 = vset.pattern.permute.xlu0 0
        %281 = vperm.xlu0 %280, %v228
        %v282 = vpop.permute.xlu0 %281
        %283 = vset.pattern.permute.xlu0 0
        %284 = vperm.xlu0 %283, %v229
        %v285 = vpop.permute.xlu0 %284
        %286 = vset.pattern.permute.xlu0 0
        %287 = vperm.xlu0 %286, %v230
        %v288 = vpop.permute.xlu0 %287
        %289 = vset.pattern.permute.xlu0 0
        %290 = vperm.xlu0 %289, %v231
        %v291 = vpop.permute.xlu0 %290
        %292 = vset.pattern.permute.xlu0 0
        %293 = vperm.xlu0 %292, %v232
        %v294 = vpop.permute.xlu0 %293
        %295 = vset.pattern.permute.xlu0 0
        %296 = vperm.xlu0 %295, %v233
        %v297 = vpop.permute.xlu0 %296
        %298 = vset.pattern.permute.xlu0 0
        %299 = vperm.xlu0 %298, %v234
        %v300 = vpop.permute.xlu0 %299
        %301 = vset.pattern.permute.xlu0 0
        %302 = vperm.xlu0 %301, %v235
        %v303 = vpop.permute.xlu0 %302
        %304 = vset.pattern.permute.xlu0 0
        %305 = vperm.xlu0 %304, %v236
        %v306 = vpop.permute.xlu0 %305
        %307 = vset.pattern.permute.xlu0 0
        %308 = vperm.xlu0 %307, %v237
        %v309 = vpop.permute.xlu0 %308
        %310 = vset.pattern.permute.xlu0 0
        %311 = vperm.xlu0 %310, %v238
        %v312 = vpop.permute.xlu0 %311
        %313 = vset.pattern.permute.xlu0 0
        %314 = vperm.xlu0 %313, %v239
        %v315 = vpop.permute.xlu0 %314
        %316 = vset.pattern.permute.xlu0 0
        %317 = vperm.xlu0 %316, %v240
        %v318 = vpop.permute.xlu0 %317
        %319 = vset.pattern.permute.xlu0 0
        %320 = vperm.xlu0 %319, %v241
        %v321 = vpop.permute.xlu0 %320
        %322 = vset.pattern.permute.xlu0 0
        %323 = vperm.xlu0 %322, %v242
        %v324 = vpop.permute.xlu0 %323
        %325 = vset.pattern.permute.xlu0 0
        %326 = vperm.xlu0 %325, %v243
        %v327 = vpop.permute.xlu0 %326
        %328 = vset.pattern.permute.xlu0 0
        %329 = vperm.xlu0 %328, %v244
        %v330 = vpop.permute.xlu0 %329
        %vm331 = vcmp.eq.s32.totalorder %v258, %v252
        %vm332 = vcmp.eq.s32.totalorder %v258, %v253
        %vm333 = vcmp.eq.s32.totalorder %v258, %v254
        %vm334 = vcmp.eq.s32.totalorder %v258, %v255
        %vm335 = vcmp.eq.s32.totalorder %v261, %v252
        %vm336 = vcmp.eq.s32.totalorder %v261, %v253
        %vm337 = vcmp.eq.s32.totalorder %v261, %v254
        %vm338 = vcmp.eq.s32.totalorder %v261, %v255
        %vm339 = vcmp.eq.s32.totalorder %v264, %v252
        %vm340 = vcmp.eq.s32.totalorder %v264, %v253
        %vm341 = vcmp.eq.s32.totalorder %v264, %v254
        %vm342 = vcmp.eq.s32.totalorder %v264, %v255
        %vm343 = vcmp.eq.s32.totalorder %v267, %v252
        %vm344 = vcmp.eq.s32.totalorder %v267, %v253
        %vm345 = vcmp.eq.s32.totalorder %v267, %v254
        %vm346 = vcmp.eq.s32.totalorder %v267, %v255
        %vm347 = vcmp.eq.s32.totalorder %v270, %v252
        %vm348 = vcmp.eq.s32.totalorder %v270, %v253
        %vm349 = vcmp.eq.s32.totalorder %v270, %v254
        %vm350 = vcmp.eq.s32.totalorder %v270, %v255
        %vm351 = vcmp.eq.s32.totalorder %v273, %v252
        %vm352 = vcmp.eq.s32.totalorder %v273, %v253
        %vm353 = vcmp.eq.s32.totalorder %v273, %v254
        %vm354 = vcmp.eq.s32.totalorder %v273, %v255
        %vm355 = vcmp.eq.s32.totalorder %v276, %v252
        %vm356 = vcmp.eq.s32.totalorder %v276, %v253
        %vm357 = vcmp.eq.s32.totalorder %v276, %v254
        %vm358 = vcmp.eq.s32.totalorder %v276, %v255
        %vm359 = vcmp.eq.s32.totalorder %v279, %v252
        %vm360 = vcmp.eq.s32.totalorder %v279, %v253
        %vm361 = vcmp.eq.s32.totalorder %v279, %v254
        %vm362 = vcmp.eq.s32.totalorder %v279, %v255
        %vm363 = vcmp.eq.s32.totalorder %v282, %v252
        %vm364 = vcmp.eq.s32.totalorder %v282, %v253
        %vm365 = vcmp.eq.s32.totalorder %v282, %v254
        %vm366 = vcmp.eq.s32.totalorder %v282, %v255
        %vm367 = vcmp.eq.s32.totalorder %v285, %v252
        %vm368 = vcmp.eq.s32.totalorder %v285, %v253
        %vm369 = vcmp.eq.s32.totalorder %v285, %v254
        %vm370 = vcmp.eq.s32.totalorder %v285, %v255
        %vm371 = vcmp.eq.s32.totalorder %v288, %v252
        %vm372 = vcmp.eq.s32.totalorder %v288, %v253
        %vm373 = vcmp.eq.s32.totalorder %v288, %v254
        %vm374 = vcmp.eq.s32.totalorder %v288, %v255
        %vm375 = vcmp.eq.s32.totalorder %v291, %v252
        %vm376 = vcmp.eq.s32.totalorder %v291, %v253
        %vm377 = vcmp.eq.s32.totalorder %v291, %v254
        %vm378 = vcmp.eq.s32.totalorder %v291, %v255
        %vm379 = vcmp.eq.s32.totalorder %v294, %v252
        %vm380 = vcmp.eq.s32.totalorder %v294, %v253
        %vm381 = vcmp.eq.s32.totalorder %v294, %v254
        %vm382 = vcmp.eq.s32.totalorder %v294, %v255
        %vm383 = vcmp.eq.s32.totalorder %v297, %v252
        %vm384 = vcmp.eq.s32.totalorder %v297, %v253
        %vm385 = vcmp.eq.s32.totalorder %v297, %v254
        %vm386 = vcmp.eq.s32.totalorder %v297, %v255
        %vm387 = vcmp.eq.s32.totalorder %v300, %v252
        %vm388 = vcmp.eq.s32.totalorder %v300, %v253
        %vm389 = vcmp.eq.s32.totalorder %v300, %v254
        %vm390 = vcmp.eq.s32.totalorder %v300, %v255
        %vm391 = vcmp.eq.s32.totalorder %v303, %v252
        %vm392 = vcmp.eq.s32.totalorder %v303, %v253
        %vm393 = vcmp.eq.s32.totalorder %v303, %v254
        %vm394 = vcmp.eq.s32.totalorder %v303, %v255
        %vm395 = vcmp.eq.s32.totalorder %v306, %v252
        %vm396 = vcmp.eq.s32.totalorder %v306, %v253
        %vm397 = vcmp.eq.s32.totalorder %v306, %v254
        %vm398 = vcmp.eq.s32.totalorder %v306, %v255
        %vm399 = vcmp.eq.s32.totalorder %v309, %v252
        %vm400 = vcmp.eq.s32.totalorder %v309, %v253
        %vm401 = vcmp.eq.s32.totalorder %v309, %v254
        %vm402 = vcmp.eq.s32.totalorder %v309, %v255
        %vm403 = vcmp.eq.s32.totalorder %v312, %v252
        %vm404 = vcmp.eq.s32.totalorder %v312, %v253
        %vm405 = vcmp.eq.s32.totalorder %v312, %v254
        %vm406 = vcmp.eq.s32.totalorder %v312, %v255
        %vm407 = vcmp.eq.s32.totalorder %v315, %v252
        %vm408 = vcmp.eq.s32.totalorder %v315, %v253
        %vm409 = vcmp.eq.s32.totalorder %v315, %v254
        %vm410 = vcmp.eq.s32.totalorder %v315, %v255
        %vm411 = vcmp.eq.s32.totalorder %v318, %v252
        %vm412 = vcmp.eq.s32.totalorder %v318, %v253
        %vm413 = vcmp.eq.s32.totalorder %v318, %v254
        %vm414 = vcmp.eq.s32.totalorder %v318, %v255
        %vm415 = vcmp.eq.s32.totalorder %v321, %v252
        %vm416 = vcmp.eq.s32.totalorder %v321, %v253
        %vm417 = vcmp.eq.s32.totalorder %v321, %v254
        %vm418 = vcmp.eq.s32.totalorder %v321, %v255
        %vm419 = vcmp.eq.s32.totalorder %v324, %v252
        %vm420 = vcmp.eq.s32.totalorder %v324, %v253
        %vm421 = vcmp.eq.s32.totalorder %v324, %v254
        %vm422 = vcmp.eq.s32.totalorder %v324, %v255
        %vm423 = vcmp.eq.s32.totalorder %v327, %v252
        %vm424 = vcmp.eq.s32.totalorder %v327, %v253
        %vm425 = vcmp.eq.s32.totalorder %v327, %v254
        %vm426 = vcmp.eq.s32.totalorder %v327, %v255
        %vm427 = vcmp.eq.s32.totalorder %v330, %v252
        %vm428 = vcmp.eq.s32.totalorder %v330, %v253
        %vm429 = vcmp.eq.s32.totalorder %v330, %v254
        %vm430 = vcmp.eq.s32.totalorder %v330, %v255
        %v431 = vsel %vm331, 1, 0
        %v432 = vsel %vm332, 1, 0
        %v433 = vsel %vm333, 1, 0
        %v434 = vsel %vm334, 1, 0
        %v435 = vsel %vm335, 1, 0
        %v436 = vsel %vm336, 1, 0
        %v437 = vsel %vm337, 1, 0
        %v438 = vsel %vm338, 1, 0
        %v439 = vsel %vm339, 1, 0
        %v440 = vsel %vm340, 1, 0
        %v441 = vsel %vm341, 1, 0
        %v442 = vsel %vm342, 1, 0
        %v443 = vsel %vm343, 1, 0
        %v444 = vsel %vm344, 1, 0
        %v445 = vsel %vm345, 1, 0
        %v446 = vsel %vm346, 1, 0
        %v447 = vsel %vm347, 1, 0
        %v448 = vsel %vm348, 1, 0
        %v449 = vsel %vm349, 1, 0
        %v450 = vsel %vm350, 1, 0
        %v451 = vsel %vm351, 1, 0
        %v452 = vsel %vm352, 1, 0
        %v453 = vsel %vm353, 1, 0
        %v454 = vsel %vm354, 1, 0
        %v455 = vsel %vm355, 1, 0
        %v456 = vsel %vm356, 1, 0
        %v457 = vsel %vm357, 1, 0
        %v458 = vsel %vm358, 1, 0
        %v459 = vsel %vm359, 1, 0
        %v460 = vsel %vm360, 1, 0
        %v461 = vsel %vm361, 1, 0
        %v462 = vsel %vm362, 1, 0
        %v463 = vsel %vm363, 1, 0
        %v464 = vsel %vm364, 1, 0
        %v465 = vsel %vm365, 1, 0
        %v466 = vsel %vm366, 1, 0
        %v467 = vsel %vm367, 1, 0
        %v468 = vsel %vm368, 1, 0
        %v469 = vsel %vm369, 1, 0
        %v470 = vsel %vm370, 1, 0
        %v471 = vsel %vm371, 1, 0
        %v472 = vsel %vm372, 1, 0
        %v473 = vsel %vm373, 1, 0
        %v474 = vsel %vm374, 1, 0
        %v475 = vsel %vm375, 1, 0
        %v476 = vsel %vm376, 1, 0
        %v477 = vsel %vm377, 1, 0
        %v478 = vsel %vm378, 1, 0
        %v479 = vsel %vm379, 1, 0
        %v480 = vsel %vm380, 1, 0
        %v481 = vsel %vm381, 1, 0
        %v482 = vsel %vm382, 1, 0
        %v483 = vsel %vm383, 1, 0
        %v484 = vsel %vm384, 1, 0
        %v485 = vsel %vm385, 1, 0
        %v486 = vsel %vm386, 1, 0
        %v487 = vsel %vm387, 1, 0
        %v488 = vsel %vm388, 1, 0
        %v489 = vsel %vm389, 1, 0
        %v490 = vsel %vm390, 1, 0
        %v491 = vsel %vm391, 1, 0
        %v492 = vsel %vm392, 1, 0
        %v493 = vsel %vm393, 1, 0
        %v494 = vsel %vm394, 1, 0
        %v495 = vsel %vm395, 1, 0
        %v496 = vsel %vm396, 1, 0
        %v497 = vsel %vm397, 1, 0
        %v498 = vsel %vm398, 1, 0
        %v499 = vsel %vm399, 1, 0
        %v500 = vsel %vm400, 1, 0
        %v501 = vsel %vm401, 1, 0
        %v502 = vsel %vm402, 1, 0
        %v503 = vsel %vm403, 1, 0
        %v504 = vsel %vm404, 1, 0
        %v505 = vsel %vm405, 1, 0
        %v506 = vsel %vm406, 1, 0
        %v507 = vsel %vm407, 1, 0
        %v508 = vsel %vm408, 1, 0
        %v509 = vsel %vm409, 1, 0
        %v510 = vsel %vm410, 1, 0
        %v511 = vsel %vm411, 1, 0
        %v512 = vsel %vm412, 1, 0
        %v513 = vsel %vm413, 1, 0
        %v514 = vsel %vm414, 1, 0
        %v515 = vsel %vm415, 1, 0
        %v516 = vsel %vm416, 1, 0
        %v517 = vsel %vm417, 1, 0
        %v518 = vsel %vm418, 1, 0
        %v519 = vsel %vm419, 1, 0
        %v520 = vsel %vm420, 1, 0
        %v521 = vsel %vm421, 1, 0
        %v522 = vsel %vm422, 1, 0
        %v523 = vsel %vm423, 1, 0
        %v524 = vsel %vm424, 1, 0
        %v525 = vsel %vm425, 1, 0
        %v526 = vsel %vm426, 1, 0
        %v527 = vsel %vm427, 1, 0
        %v528 = vsel %vm428, 1, 0
        %v529 = vsel %vm429, 1, 0
        %v530 = vsel %vm430, 1, 0
        %v531 = vcvt.s32.f32 %v431
        %v532 = vcvt.s32.f32 %v432
        %v533 = vcvt.s32.f32 %v433
        %v534 = vcvt.s32.f32 %v434
        %v535 = vcvt.s32.f32 %v435
        %v536 = vcvt.s32.f32 %v436
        %v537 = vcvt.s32.f32 %v437
        %v538 = vcvt.s32.f32 %v438
        %v539 = vcvt.s32.f32 %v439
        %v540 = vcvt.s32.f32 %v440
        %v541 = vcvt.s32.f32 %v441
        %v542 = vcvt.s32.f32 %v442
        %v543 = vcvt.s32.f32 %v443
        %v544 = vcvt.s32.f32 %v444
        %v545 = vcvt.s32.f32 %v445
        %v546 = vcvt.s32.f32 %v446
        %v547 = vcvt.s32.f32 %v447
        %v548 = vcvt.s32.f32 %v448
        %v549 = vcvt.s32.f32 %v449
        %v550 = vcvt.s32.f32 %v450
        %v551 = vcvt.s32.f32 %v451
        %v552 = vcvt.s32.f32 %v452
        %v553 = vcvt.s32.f32 %v453
        %v554 = vcvt.s32.f32 %v454
        %v555 = vcvt.s32.f32 %v455
        %v556 = vcvt.s32.f32 %v456
        %v557 = vcvt.s32.f32 %v457
        %v558 = vcvt.s32.f32 %v458
        %v559 = vcvt.s32.f32 %v459
        %v560 = vcvt.s32.f32 %v460
        %v561 = vcvt.s32.f32 %v461
        %v562 = vcvt.s32.f32 %v462
        %v563 = vcvt.s32.f32 %v463
        %v564 = vcvt.s32.f32 %v464
        %v565 = vcvt.s32.f32 %v465
        %v566 = vcvt.s32.f32 %v466
        %v567 = vcvt.s32.f32 %v467
        %v568 = vcvt.s32.f32 %v468
        %v569 = vcvt.s32.f32 %v469
        %v570 = vcvt.s32.f32 %v470
        %v571 = vcvt.s32.f32 %v471
        %v572 = vcvt.s32.f32 %v472
        %v573 = vcvt.s32.f32 %v473
        %v574 = vcvt.s32.f32 %v474
        %v575 = vcvt.s32.f32 %v475
        %v576 = vcvt.s32.f32 %v476
        %v577 = vcvt.s32.f32 %v477
        %v578 = vcvt.s32.f32 %v478
        %v579 = vcvt.s32.f32 %v479
        %v580 = vcvt.s32.f32 %v480
        %v581 = vcvt.s32.f32 %v481
        %v582 = vcvt.s32.f32 %v482
        %v583 = vcvt.s32.f32 %v483
        %v584 = vcvt.s32.f32 %v484
        %v585 = vcvt.s32.f32 %v485
        %v586 = vcvt.s32.f32 %v486
        %v587 = vcvt.s32.f32 %v487
        %v588 = vcvt.s32.f32 %v488
        %v589 = vcvt.s32.f32 %v489
        %v590 = vcvt.s32.f32 %v490
        %v591 = vcvt.s32.f32 %v491
        %v592 = vcvt.s32.f32 %v492
        %v593 = vcvt.s32.f32 %v493
        %v594 = vcvt.s32.f32 %v494
        %v595 = vcvt.s32.f32 %v495
        %v596 = vcvt.s32.f32 %v496
        %v597 = vcvt.s32.f32 %v497
        %v598 = vcvt.s32.f32 %v498
        %v599 = vcvt.s32.f32 %v499
        %v600 = vcvt.s32.f32 %v500
        %v601 = vcvt.s32.f32 %v501
        %v602 = vcvt.s32.f32 %v502
        %v603 = vcvt.s32.f32 %v503
        %v604 = vcvt.s32.f32 %v504
        %v605 = vcvt.s32.f32 %v505
        %v606 = vcvt.s32.f32 %v506
        %v607 = vcvt.s32.f32 %v507
        %v608 = vcvt.s32.f32 %v508
        %v609 = vcvt.s32.f32 %v509
        %v610 = vcvt.s32.f32 %v510
        %v611 = vcvt.s32.f32 %v511
        %v612 = vcvt.s32.f32 %v512
        %v613 = vcvt.s32.f32 %v513
        %v614 = vcvt.s32.f32 %v514
        %v615 = vcvt.s32.f32 %v515
        %v616 = vcvt.s32.f32 %v516
        %v617 = vcvt.s32.f32 %v517
        %v618 = vcvt.s32.f32 %v518
        %v619 = vcvt.s32.f32 %v519
        %v620 = vcvt.s32.f32 %v520
        %v621 = vcvt.s32.f32 %v521
        %v622 = vcvt.s32.f32 %v522
        %v623 = vcvt.s32.f32 %v523
        %v624 = vcvt.s32.f32 %v524
        %v625 = vcvt.s32.f32 %v525
        %v626 = vcvt.s32.f32 %v526
        %v627 = vcvt.s32.f32 %v527
        %v628 = vcvt.s32.f32 %v528
        %v629 = vcvt.s32.f32 %v529
        %v630 = vcvt.s32.f32 %v530
        %v631 = vld [vmem:[#allocation2] sm:$0xff]
        %v632 = vld [vmem:[#allocation2 + $0x8] sm:$0xff]
        %v633 = vld [vmem:[#allocation2 + $0x10] sm:$0xff]
        %v634 = vld [vmem:[#allocation2 + $0x18] sm:$0xff]
        %v635 = vld [vmem:[#allocation2 + $0x20] sm:$0xff]
        %v636 = vld [vmem:[#allocation2 + $0x28] sm:$0xff]
        %v637 = vld [vmem:[#allocation2 + $0x30] sm:$0xff]
        %v638 = vld [vmem:[#allocation2 + $0x38] sm:$0xff]
        %v639 = vld [vmem:[#allocation2 + $0x40] sm:$0xff]
        %v640 = vld [vmem:[#allocation2 + $0x48] sm:$0xff]
        %v641 = vld [vmem:[#allocation2 + $0x50] sm:$0xff]
        %v642 = vld [vmem:[#allocation2 + $0x58] sm:$0xff]
        %v643 = vld [vmem:[#allocation2 + $0x60] sm:$0xff]
        %v644 = vld [vmem:[#allocation2 + $0x68] sm:$0xff]
        %v645 = vld [vmem:[#allocation2 + $0x70] sm:$0xff]
        %v646 = vld [vmem:[#allocation2 + $0x78] sm:$0xff]
        %v647 = vld [vmem:[#allocation2 + $0x80] sm:$0xff]
        %v648 = vld [vmem:[#allocation2 + $0x88] sm:$0xff]
        %v649 = vld [vmem:[#allocation2 + $0x90] sm:$0xff]
        %v650 = vld [vmem:[#allocation2 + $0x98] sm:$0xff]
        %v651 = vld [vmem:[#allocation2 + $0xa0] sm:$0xff]
        %v652 = vld [vmem:[#allocation2 + $0xa8] sm:$0xff]
        %v653 = vld [vmem:[#allocation2 + $0xb0] sm:$0xff]
        %v654 = vld [vmem:[#allocation2 + $0xb8] sm:$0xff]
        %v655 = vld [vmem:[#allocation2 + $0xc0] sm:$0xff]
        %v656 = vld [vmem:[%s162] sm:$0xff]
        %v657 = vld [vmem:[%s162 + $0x8] sm:$0xff]
        %v658 = vld [vmem:[%s162 + $0x10] sm:$0xff]
        %v659 = vld [vmem:[%s162 + $0x18] sm:$0xff]
        %v660 = vld [vmem:[%s162 + $0x20] sm:$0xff]
        %v661 = vld [vmem:[%s162 + $0x28] sm:$0xff]
        %v662 = vld [vmem:[%s162 + $0x30] sm:$0xff]
        %v663 = vld [vmem:[%s162 + $0x38] sm:$0xff]
        %v664 = vld [vmem:[%s162 + $0x40] sm:$0xff]
        %v665 = vld [vmem:[%s162 + $0x48] sm:$0xff]
        %v666 = vld [vmem:[%s162 + $0x50] sm:$0xff]
        %v667 = vld [vmem:[%s162 + $0x58] sm:$0xff]
        %v668 = vld [vmem:[%s162 + $0x60] sm:$0xff]
        %v669 = vld [vmem:[%s162 + $0x68] sm:$0xff]
        %v670 = vld [vmem:[%s162 + $0x70] sm:$0xff]
        %v671 = vld [vmem:[%s162 + $0x78] sm:$0xff]
        %v672 = vld [vmem:[%s162 + $0x80] sm:$0xff]
        %v673 = vld [vmem:[%s162 + $0x88] sm:$0xff]
        %v674 = vld [vmem:[%s162 + $0x90] sm:$0xff]
        %v675 = vld [vmem:[%s162 + $0x98] sm:$0xff]
        %v676 = vld [vmem:[%s162 + $0xa0] sm:$0xff]
        %v677 = vld [vmem:[%s162 + $0xa8] sm:$0xff]
        %v678 = vld [vmem:[%s162 + $0xb0] sm:$0xff]
        %v679 = vld [vmem:[%s162 + $0xb8] sm:$0xff]
        %v680 = vld [vmem:[%s162 + $0xc0] sm:$0xff]
        %v681 = vld [vmem:[%s162 + $0xc8] sm:$0xff]
        %v682 = vld [vmem:[%s162 + $0xd0] sm:$0xff]
        %v683 = vld [vmem:[%s162 + $0xd8] sm:$0xff]
        %v684 = vld [vmem:[%s162 + $0xe0] sm:$0xff]
        %v685 = vld [vmem:[%s162 + $0xe8] sm:$0xff]
        %v686 = vld [vmem:[%s162 + $0xf0] sm:$0xff]
        %v687 = vld [vmem:[%s162 + $0xf8] sm:$0xff]
        %v688 = vld [vmem:[%s162 + $0x100] sm:$0xff]
        %v689 = vld [vmem:[%s162 + $0x108] sm:$0xff]
        %v690 = vld [vmem:[%s162 + $0x110] sm:$0xff]
        %v691 = vld [vmem:[%s162 + $0x118] sm:$0xff]
        %v692 = vld [vmem:[%s162 + $0x120] sm:$0xff]
        %v693 = vld [vmem:[%s162 + $0x128] sm:$0xff]
        %v694 = vld [vmem:[%s162 + $0x130] sm:$0xff]
        %v695 = vld [vmem:[%s162 + $0x138] sm:$0xff]
        %v696 = vld [vmem:[%s162 + $0x140] sm:$0xff]
        %v697 = vld [vmem:[%s162 + $0x148] sm:$0xff]
        %v698 = vld [vmem:[%s162 + $0x150] sm:$0xff]
        %v699 = vld [vmem:[%s162 + $0x158] sm:$0xff]
        %v700 = vld [vmem:[%s162 + $0x160] sm:$0xff]
        %v701 = vld [vmem:[%s162 + $0x168] sm:$0xff]
        %v702 = vld [vmem:[%s162 + $0x170] sm:$0xff]
        %v703 = vld [vmem:[%s162 + $0x178] sm:$0xff]
        %v704 = vld [vmem:[%s162 + $0x180] sm:$0xff]
        %v705 = vld [vmem:[%s162 + $0x188] sm:$0xff]
        %v706 = vld [vmem:[%s162 + $0x190] sm:$0xff]
        %v707 = vld [vmem:[%s162 + $0x198] sm:$0xff]
        %v708 = vld [vmem:[%s162 + $0x1a0] sm:$0xff]
        %v709 = vld [vmem:[%s162 + $0x1a8] sm:$0xff]
        %v710 = vld [vmem:[%s162 + $0x1b0] sm:$0xff]
        %v711 = vld [vmem:[%s162 + $0x1b8] sm:$0xff]
        %v712 = vld [vmem:[%s162 + $0x1c0] sm:$0xff]
        %v713 = vld [vmem:[%s162 + $0x1c8] sm:$0xff]
        %v714 = vld [vmem:[%s162 + $0x1d0] sm:$0xff]
        %v715 = vld [vmem:[%s162 + $0x1d8] sm:$0xff]
        %v716 = vld [vmem:[%s162 + $0x1e0] sm:$0xff]
        %v717 = vld [vmem:[%s162 + $0x1e8] sm:$0xff]
        %v718 = vld [vmem:[%s162 + $0x1f0] sm:$0xff]
        %v719 = vld [vmem:[%s162 + $0x1f8] sm:$0xff]
        %720 = vmatprep.subr.mxu0 0.0
        %721 = vmatpush1.msra.mxu0 %v656
        %722 = vmatprep.subr.mxu0 0.0
        %723 = vmatpush1.msra.mxu0 %v657
        %724 = vmatprep.subr.mxu0 0.0
        %725 = vmatpush1.msra.mxu0 %v658
        %726 = vmatprep.subr.mxu0 0.0
        %727 = vmatpush1.msra.mxu0 %v659
        %728 = vmatprep.subr.mxu0 0.0
        %729 = vmatpush1.msra.mxu0 %v660
        %730 = vmatprep.subr.mxu0 0.0
        %731 = vmatpush1.msra.mxu0 %v661
        %732 = vmatprep.subr.mxu0 0.0
        %733 = vmatpush1.msra.mxu0 %v662
        %734 = vmatprep.subr.mxu0 0.0
        %735 = vmatpush1.msra.mxu0 %v663
        %736 = vmatprep.subr.mxu0 0.0
        %737 = vmatpush1.msra.mxu0 %v664
        %738 = vmatprep.subr.mxu0 0.0
        %739 = vmatpush1.msra.mxu0 %v665
        %740 = vmatprep.subr.mxu0 0.0
        %741 = vmatpush1.msra.mxu0 %v666
        %742 = vmatprep.subr.mxu0 0.0
        %743 = vmatpush1.msra.mxu0 %v667
        %744 = vmatprep.subr.mxu0 0.0
        %745 = vmatpush1.msra.mxu0 %v668
        %746 = vmatprep.subr.mxu0 0.0
        %747 = vmatpush1.msra.mxu0 %v669
        %748 = vmatprep.subr.mxu0 0.0
        %749 = vmatpush1.msra.mxu0 %v670
        %750 = vmatprep.subr.mxu0 0.0
        %751 = vmatpush1.msra.mxu0 %v671
        %752 = vmatprep.subr.mxu0 0.0
        %753 = vmatpush1.msra.mxu0 %v672
        %754 = vmatprep.subr.mxu0 0.0
        %755 = vmatpush1.msra.mxu0 %v673
        %756 = vmatprep.subr.mxu0 0.0
        %757 = vmatpush1.msra.mxu0 %v674
        %758 = vmatprep.subr.mxu0 0.0
        %759 = vmatpush1.msra.mxu0 %v675
        %760 = vmatprep.subr.mxu0 0.0
        %761 = vmatpush1.msra.mxu0 %v676
        %762 = vmatprep.subr.mxu0 0.0
        %763 = vmatpush1.msra.mxu0 %v677
        %764 = vmatprep.subr.mxu0 0.0
        %765 = vmatpush1.msra.mxu0 %v678
        %766 = vmatprep.subr.mxu0 0.0
        %767 = vmatpush1.msra.mxu0 %v679
        %768 = vmatprep.subr.mxu0 0.0
        %769 = vmatpush1.msra.mxu0 %v680
        %770 = vmatprep.subr.mxu0 0.0
        %771 = vmatpush1.msra.mxu0 %v681
        %772 = vmatprep.subr.mxu0 0.0
        %773 = vmatpush1.msra.mxu0 %v682
        %774 = vmatprep.subr.mxu0 0.0
        %775 = vmatpush1.msra.mxu0 %v683
        %776 = vmatprep.subr.mxu0 0.0
        %777 = vmatpush1.msra.mxu0 %v684
        %778 = vmatprep.subr.mxu0 0.0
        %779 = vmatpush1.msra.mxu0 %v685
        %780 = vmatprep.subr.mxu0 0.0
        %781 = vmatpush1.msra.mxu0 %v686
        %782 = vmatprep.subr.mxu0 0.0
        %783 = vmatpush1.msra.mxu0 %v687
        %784 = vmatprep.mubr.f32.mxu0 %v532
        %785 = vmatmul.mubr.f32.gmra.mrb[0].mxu0 %v531
        %v786 = vpop.f32.mrb[0].mxu0
        %v787 = vadd.f32 0.0, %v786
        %v788 = vpop.f32.mrb[0].mxu0
        %789 = vmatprep.mubr.f32.mxu0 %v536
        %790 = vmatmul.mubr.f32.gmra.mrb[0].mxu0 %v535
        %v791 = vpop.f32.mrb[0].mxu0
        %v792 = vadd.f32 0.0, %v791
        %v793 = vpop.f32.mrb[0].mxu0
        %794 = vmatprep.mubr.f32.mxu0 %v540
        %795 = vmatmul.mubr.f32.gmra.mrb[0].mxu0 %v539
        %v796 = vpop.f32.mrb[0].mxu0
        %v797 = vadd.f32 0.0, %v796
        %v798 = vpop.f32.mrb[0].mxu0
        %799 = vmatprep.mubr.f32.mxu0 %v544
        %800 = vmatmul.mubr.f32.gmra.mrb[0].mxu0 %v543
        %v801 = vpop.f32.mrb[0].mxu0
        %v802 = vadd.f32 0.0, %v801
        %v803 = vpop.f32.mrb[0].mxu0
        %804 = vmatprep.mubr.f32.mxu0 %v548
        %805 = vmatmul.mubr.f32.gmra.mrb[0].mxu0 %v547
        %v806 = vpop.f32.mrb[0].mxu0
        %v807 = vadd.f32 0.0, %v806
        %v808 = vpop.f32.mrb[0].mxu0
        %809 = vmatprep.mubr.f32.mxu0 %v552
        %810 = vmatmul.mubr.f32.gmra.mrb[0].mxu0 %v551
        %v811 = vpop.f32.mrb[0].mxu0
        %v812 = vadd.f32 0.0, %v811
        %v813 = vpop.f32.mrb[0].mxu0
        %814 = vmatprep.mubr.f32.mxu0 %v556
        %815 = vmatmul.mubr.f32.gmra.mrb[0].mxu0 %v555
        %v816 = vpop.f32.mrb[0].mxu0
        %v817 = vadd.f32 0.0, %v816
        %v818 = vpop.f32.mrb[0].mxu0
        %819 = vmatprep.mubr.f32.mxu0 %v560
        %820 = vmatmul.mubr.f32.gmra.mrb[0].mxu0 %v559
        %v821 = vpop.f32.mrb[0].mxu0
        %v822 = vadd.f32 0.0, %v821
        %v823 = vpop.f32.mrb[0].mxu0
        %824 = vmatprep.mubr.f32.mxu0 %v564
        %825 = vmatmul.mubr.f32.gmra.mrb[0].mxu0 %v563
        %v826 = vpop.f32.mrb[0].mxu0
        %v827 = vadd.f32 0.0, %v826
        %v828 = vpop.f32.mrb[0].mxu0
        %829 = vmatprep.mubr.f32.mxu0 %v568
        %830 = vmatmul.mubr.f32.gmra.mrb[0].mxu0 %v567
        %v831 = vpop.f32.mrb[0].mxu0
        %v832 = vadd.f32 0.0, %v831
        %v833 = vpop.f32.mrb[0].mxu0
        %834 = vmatprep.mubr.f32.mxu0 %v572
        %835 = vmatmul.mubr.f32.gmra.mrb[0].mxu0 %v571
        %v836 = vpop.f32.mrb[0].mxu0
        %v837 = vadd.f32 0.0, %v836
        %v838 = vpop.f32.mrb[0].mxu0
        %839 = vmatprep.mubr.f32.mxu0 %v576
        %840 = vmatmul.mubr.f32.gmra.mrb[0].mxu0 %v575
        %v841 = vpop.f32.mrb[0].mxu0
        %v842 = vadd.f32 0.0, %v841
        %v843 = vpop.f32.mrb[0].mxu0
        %844 = vmatprep.mubr.f32.mxu0 %v580
        %845 = vmatmul.mubr.f32.gmra.mrb[0].mxu0 %v579
        %v846 = vpop.f32.mrb[0].mxu0
        %v847 = vadd.f32 0.0, %v846
        %v848 = vpop.f32.mrb[0].mxu0
        %849 = vmatprep.mubr.f32.mxu0 %v584
        %850 = vmatmul.mubr.f32.gmra.mrb[0].mxu0 %v583
        %v851 = vpop.f32.mrb[0].mxu0
        %v852 = vadd.f32 0.0, %v851
        %v853 = vpop.f32.mrb[0].mxu0
        %854 = vmatprep.mubr.f32.mxu0 %v588
        %855 = vmatmul.mubr.f32.gmra.mrb[0].mxu0 %v587
        %v856 = vpop.f32.mrb[0].mxu0
        %v857 = vadd.f32 0.0, %v856
        %v858 = vpop.f32.mrb[0].mxu0
        %859 = vmatprep.mubr.f32.mxu0 %v592
        %860 = vmatmul.mubr.f32.gmra.mrb[0].mxu0 %v591
        %v861 = vpop.f32.mrb[0].mxu0
        %v862 = vadd.f32 0.0, %v861
        %v863 = vpop.f32.mrb[0].mxu0
        %864 = vmatprep.mubr.f32.mxu0 %v596
        %865 = vmatmul.mubr.f32.gmra.mrb[0].mxu0 %v595
        %v866 = vpop.f32.mrb[0].mxu0
        %v867 = vadd.f32 0.0, %v866
        %v868 = vpop.f32.mrb[0].mxu0
        %869 = vmatprep.mubr.f32.mxu0 %v600
        %870 = vmatmul.mubr.f32.gmra.mrb[0].mxu0 %v599
        %v871 = vpop.f32.mrb[0].mxu0
        %v872 = vadd.f32 0.0, %v871
        %v873 = vpop.f32.mrb[0].mxu0
        %874 = vmatprep.mubr.f32.mxu0 %v604
        %875 = vmatmul.mubr.f32.gmra.mrb[0].mxu0 %v603
        %v876 = vpop.f32.mrb[0].mxu0
        %v877 = vadd.f32 0.0, %v876
        %v878 = vpop.f32.mrb[0].mxu0
        %879 = vmatprep.mubr.f32.mxu0 %v608
        %880 = vmatmul.mubr.f32.gmra.mrb[0].mxu0 %v607
        %v881 = vpop.f32.mrb[0].mxu0
        %v882 = vadd.f32 0.0, %v881
        %v883 = vpop.f32.mrb[0].mxu0
        %884 = vmatprep.mubr.f32.mxu0 %v612
        %885 = vmatmul.mubr.f32.gmra.mrb[0].mxu0 %v611
        %v886 = vpop.f32.mrb[0].mxu0
        %v887 = vadd.f32 0.0, %v886
        %v888 = vpop.f32.mrb[0].mxu0
        %889 = vmatprep.mubr.f32.mxu0 %v616
        %890 = vmatmul.mubr.f32.gmra.mrb[0].mxu0 %v615
        %v891 = vpop.f32.mrb[0].mxu0
        %v892 = vadd.f32 0.0, %v891
        %v893 = vpop.f32.mrb[0].mxu0
        %894 = vmatprep.mubr.f32.mxu0 %v620
        %895 = vmatmul.mubr.f32.gmra.mrb[0].mxu0 %v619
        %v896 = vpop.f32.mrb[0].mxu0
        %v897 = vadd.f32 0.0, %v896
        %v898 = vpop.f32.mrb[0].mxu0
        %899 = vmatprep.mubr.f32.mxu0 %v624
        %900 = vmatmul.mubr.f32.gmra.mrb[0].mxu0 %v623
        %v901 = vpop.f32.mrb[0].mxu0
        %v902 = vadd.f32 0.0, %v901
        %v903 = vpop.f32.mrb[0].mxu0
        %904 = vmatprep.mubr.f32.mxu0 %v628
        %905 = vmatmul.mubr.f32.gmra.mrb[0].mxu0 %v627
        %v906 = vpop.f32.mrb[0].mxu0
        %v907 = vadd.f32 0.0, %v906
        %v908 = vpop.f32.mrb[0].mxu0
        %909 = vdwg.mxu0
        %910 = vmatprep.subr.mxu0 0.0
        %911 = vmatpush1.msra.mxu0 %v688
        %912 = vmatprep.subr.mxu0 0.0
        %913 = vmatpush1.msra.mxu0 %v689
        %914 = vmatprep.subr.mxu0 0.0
        %915 = vmatpush1.msra.mxu0 %v690
        %916 = vmatprep.subr.mxu0 0.0
        %917 = vmatpush1.msra.mxu0 %v691
        %918 = vmatprep.subr.mxu0 0.0
        %919 = vmatpush1.msra.mxu0 %v692
        %920 = vmatprep.subr.mxu0 0.0
        %921 = vmatpush1.msra.mxu0 %v693
        %922 = vmatprep.subr.mxu0 0.0
        %923 = vmatpush1.msra.mxu0 %v694
        %924 = vmatprep.subr.mxu0 0.0
        %925 = vmatpush1.msra.mxu0 %v695
        %926 = vmatprep.subr.mxu0 0.0
        %927 = vmatpush1.msra.mxu0 %v696
        %928 = vmatprep.subr.mxu0 0.0
        %929 = vmatpush1.msra.mxu0 %v697
        %930 = vmatprep.subr.mxu0 0.0
        %931 = vmatpush1.msra.mxu0 %v698
        %932 = vmatprep.subr.mxu0 0.0
        %933 = vmatpush1.msra.mxu0 %v699
        %934 = vmatprep.subr.mxu0 0.0
        %935 = vmatpush1.msra.mxu0 %v700
        %936 = vmatprep.subr.mxu0 0.0
        %937 = vmatpush1.msra.mxu0 %v701
        %938 = vmatprep.subr.mxu0 0.0
        %939 = vmatpush1.msra.mxu0 %v702
        %940 = vmatprep.subr.mxu0 0.0
        %941 = vmatpush1.msra.mxu0 %v703
        %942 = vmatprep.subr.mxu0 0.0
        %943 = vmatpush1.msra.mxu0 %v704
        %944 = vmatprep.subr.mxu0 0.0
        %945 = vmatpush1.msra.mxu0 %v705
        %946 = vmatprep.subr.mxu0 0.0
        %947 = vmatpush1.msra.mxu0 %v706
        %948 = vmatprep.subr.mxu0 0.0
        %949 = vmatpush1.msra.mxu0 %v707
        %950 = vmatprep.subr.mxu0 0.0
        %951 = vmatpush1.msra.mxu0 %v708
        %952 = vmatprep.subr.mxu0 0.0
        %953 = vmatpush1.msra.mxu0 %v709
        %954 = vmatprep.subr.mxu0 0.0
        %955 = vmatpush1.msra.mxu0 %v710
        %956 = vmatprep.subr.mxu0 0.0
        %957 = vmatpush1.msra.mxu0 %v711
        %958 = vmatprep.subr.mxu0 0.0
        %959 = vmatpush1.msra.mxu0 %v712
        %960 = vmatprep.subr.mxu0 0.0
        %961 = vmatpush1.msra.mxu0 %v713
        %962 = vmatprep.subr.mxu0 0.0
        %963 = vmatpush1.msra.mxu0 %v714
        %964 = vmatprep.subr.mxu0 0.0
        %965 = vmatpush1.msra.mxu0 %v715
        %966 = vmatprep.subr.mxu0 0.0
        %967 = vmatpush1.msra.mxu0 %v716
        %968 = vmatprep.subr.mxu0 0.0
        %969 = vmatpush1.msra.mxu0 %v717
        %970 = vmatprep.subr.mxu0 0.0
        %971 = vmatpush1.msra.mxu0 %v718
        %972 = vmatprep.subr.mxu0 0.0
        %973 = vmatpush1.msra.mxu0 %v719
        %974 = vmatprep.mubr.f32.mxu0 %v534
        %975 = vmatmul.mubr.f32.gmra.mrb[0].mxu0 %v533
        %v976 = vpop.f32.mrb[0].mxu0
        %v977 = vadd.f32 %v787, %v976
        %v978 = vpop.f32.mrb[0].mxu0
        %979 = vmatprep.mubr.f32.mxu0 %v538
        %980 = vmatmul.mubr.f32.gmra.mrb[0].mxu0 %v537
        %v981 = vpop.f32.mrb[0].mxu0
        %v982 = vadd.f32 %v792, %v981
        %v983 = vpop.f32.mrb[0].mxu0
        %984 = vmatprep.mubr.f32.mxu0 %v542
        %985 = vmatmul.mubr.f32.gmra.mrb[0].mxu0 %v541
        %v986 = vpop.f32.mrb[0].mxu0
        %v987 = vadd.f32 %v797, %v986
        %v988 = vpop.f32.mrb[0].mxu0
        %989 = vmatprep.mubr.f32.mxu0 %v546
        %990 = vmatmul.mubr.f32.gmra.mrb[0].mxu0 %v545
        %v991 = vpop.f32.mrb[0].mxu0
        %v992 = vadd.f32 %v802, %v991
        %v993 = vpop.f32.mrb[0].mxu0
        %994 = vmatprep.mubr.f32.mxu0 %v550
        %995 = vmatmul.mubr.f32.gmra.mrb[0].mxu0 %v549
        %v996 = vpop.f32.mrb[0].mxu0
        %v997 = vadd.f32 %v807, %v996
        %v998 = vpop.f32.mrb[0].mxu0
        %999 = vmatprep.mubr.f32.mxu0 %v554
        %1000 = vmatmul.mubr.f32.gmra.mrb[0].mxu0 %v553
        %v1001 = vpop.f32.mrb[0].mxu0
        %v1002 = vadd.f32 %v812, %v1001
        %v1003 = vpop.f32.mrb[0].mxu0
        %1004 = vmatprep.mubr.f32.mxu0 %v558
        %1005 = vmatmul.mubr.f32.gmra.mrb[0].mxu0 %v557
        %v1006 = vpop.f32.mrb[0].mxu0
        %v1007 = vadd.f32 %v817, %v1006
        %v1008 = vpop.f32.mrb[0].mxu0
        %1009 = vmatprep.mubr.f32.mxu0 %v562
        %1010 = vmatmul.mubr.f32.gmra.mrb[0].mxu0 %v561
        %v1011 = vpop.f32.mrb[0].mxu0
        %v1012 = vadd.f32 %v822, %v1011
        %v1013 = vpop.f32.mrb[0].mxu0
        %1014 = vmatprep.mubr.f32.mxu0 %v566
        %1015 = vmatmul.mubr.f32.gmra.mrb[0].mxu0 %v565
        %v1016 = vpop.f32.mrb[0].mxu0
        %v1017 = vadd.f32 %v827, %v1016
        %v1018 = vpop.f32.mrb[0].mxu0
        %1019 = vmatprep.mubr.f32.mxu0 %v570
        %1020 = vmatmul.mubr.f32.gmra.mrb[0].mxu0 %v569
        %v1021 = vpop.f32.mrb[0].mxu0
        %v1022 = vadd.f32 %v832, %v1021
        %v1023 = vpop.f32.mrb[0].mxu0
        %1024 = vmatprep.mubr.f32.mxu0 %v574
        %1025 = vmatmul.mubr.f32.gmra.mrb[0].mxu0 %v573
        %v1026 = vpop.f32.mrb[0].mxu0
        %v1027 = vadd.f32 %v837, %v1026
        %v1028 = vpop.f32.mrb[0].mxu0
        %1029 = vmatprep.mubr.f32.mxu0 %v578
        %1030 = vmatmul.mubr.f32.gmra.mrb[0].mxu0 %v577
        %v1031 = vpop.f32.mrb[0].mxu0
        %v1032 = vadd.f32 %v842, %v1031
        %v1033 = vpop.f32.mrb[0].mxu0
        %1034 = vmatprep.mubr.f32.mxu0 %v582
        %1035 = vmatmul.mubr.f32.gmra.mrb[0].mxu0 %v581
        %v1036 = vpop.f32.mrb[0].mxu0
        %v1037 = vadd.f32 %v847, %v1036
        %v1038 = vpop.f32.mrb[0].mxu0
        %1039 = vmatprep.mubr.f32.mxu0 %v586
        %1040 = vmatmul.mubr.f32.gmra.mrb[0].mxu0 %v585
        %v1041 = vpop.f32.mrb[0].mxu0
        %v1042 = vadd.f32 %v852, %v1041
        %v1043 = vpop.f32.mrb[0].mxu0
        %1044 = vmatprep.mubr.f32.mxu0 %v590
        %1045 = vmatmul.mubr.f32.gmra.mrb[0].mxu0 %v589
        %v1046 = vpop.f32.mrb[0].mxu0
        %v1047 = vadd.f32 %v857, %v1046
        %v1048 = vpop.f32.mrb[0].mxu0
        %1049 = vmatprep.mubr.f32.mxu0 %v594
        %1050 = vmatmul.mubr.f32.gmra.mrb[0].mxu0 %v593
        %v1051 = vpop.f32.mrb[0].mxu0
        %v1052 = vadd.f32 %v862, %v1051
        %v1053 = vpop.f32.mrb[0].mxu0
        %1054 = vmatprep.mubr.f32.mxu0 %v598
        %1055 = vmatmul.mubr.f32.gmra.mrb[0].mxu0 %v597
        %v1056 = vpop.f32.mrb[0].mxu0
        %v1057 = vadd.f32 %v867, %v1056
        %v1058 = vpop.f32.mrb[0].mxu0
        %1059 = vmatprep.mubr.f32.mxu0 %v602
        %1060 = vmatmul.mubr.f32.gmra.mrb[0].mxu0 %v601
        %v1061 = vpop.f32.mrb[0].mxu0
        %v1062 = vadd.f32 %v872, %v1061
        %v1063 = vpop.f32.mrb[0].mxu0
        %1064 = vmatprep.mubr.f32.mxu0 %v606
        %1065 = vmatmul.mubr.f32.gmra.mrb[0].mxu0 %v605
        %v1066 = vpop.f32.mrb[0].mxu0
        %v1067 = vadd.f32 %v877, %v1066
        %v1068 = vpop.f32.mrb[0].mxu0
        %1069 = vmatprep.mubr.f32.mxu0 %v610
        %1070 = vmatmul.mubr.f32.gmra.mrb[0].mxu0 %v609
        %v1071 = vpop.f32.mrb[0].mxu0
        %v1072 = vadd.f32 %v882, %v1071
        %v1073 = vpop.f32.mrb[0].mxu0
        %1074 = vmatprep.mubr.f32.mxu0 %v614
        %1075 = vmatmul.mubr.f32.gmra.mrb[0].mxu0 %v613
        %v1076 = vpop.f32.mrb[0].mxu0
        %v1077 = vadd.f32 %v887, %v1076
        %v1078 = vpop.f32.mrb[0].mxu0
        %1079 = vmatprep.mubr.f32.mxu0 %v618
        %1080 = vmatmul.mubr.f32.gmra.mrb[0].mxu0 %v617
        %v1081 = vpop.f32.mrb[0].mxu0
        %v1082 = vadd.f32 %v892, %v1081
        %v1083 = vpop.f32.mrb[0].mxu0
        %1084 = vmatprep.mubr.f32.mxu0 %v622
        %1085 = vmatmul.mubr.f32.gmra.mrb[0].mxu0 %v621
        %v1086 = vpop.f32.mrb[0].mxu0
        %v1087 = vadd.f32 %v897, %v1086
        %v1088 = vpop.f32.mrb[0].mxu0
        %1089 = vmatprep.mubr.f32.mxu0 %v626
        %1090 = vmatmul.mubr.f32.gmra.mrb[0].mxu0 %v625
        %v1091 = vpop.f32.mrb[0].mxu0
        %v1092 = vadd.f32 %v902, %v1091
        %v1093 = vpop.f32.mrb[0].mxu0
        %1094 = vmatprep.mubr.f32.mxu0 %v630
        %1095 = vmatmul.mubr.f32.gmra.mrb[0].mxu0 %v629
        %v1096 = vpop.f32.mrb[0].mxu0
        %v1097 = vadd.f32 %v907, %v1096
        %v1098 = vpop.f32.mrb[0].mxu0
        %1099 = vdwg.mxu0
        %v1100 = vadd.f32 %v631, %v977
        %v1101 = vadd.f32 %v632, %v982
        %v1102 = vadd.f32 %v633, %v987
        %v1103 = vadd.f32 %v634, %v992
        %v1104 = vadd.f32 %v635, %v997
        %v1105 = vadd.f32 %v636, %v1002
        %v1106 = vadd.f32 %v637, %v1007
        %v1107 = vadd.f32 %v638, %v1012
        %v1108 = vadd.f32 %v639, %v1017
        %v1109 = vadd.f32 %v640, %v1022
        %v1110 = vadd.f32 %v641, %v1027
        %v1111 = vadd.f32 %v642, %v1032
        %v1112 = vadd.f32 %v643, %v1037
        %v1113 = vadd.f32 %v644, %v1042
        %v1114 = vadd.f32 %v645, %v1047
        %v1115 = vadd.f32 %v646, %v1052
        %v1116 = vadd.f32 %v647, %v1057
        %v1117 = vadd.f32 %v648, %v1062
        %v1118 = vadd.f32 %v649, %v1067
        %v1119 = vadd.f32 %v650, %v1072
        %v1120 = vadd.f32 %v651, %v1077
        %v1121 = vadd.f32 %v652, %v1082
        %v1122 = vadd.f32 %v653, %v1087
        %v1123 = vadd.f32 %v654, %v1092
        %v1124 = vadd.f32 %v655, %v1097
        %1125 = vst [vmem:[#allocation2] sm:$0xff] %v1100
        %1126 = vst [vmem:[#allocation2 + $0x8] sm:$0xff] %v1101
        %1127 = vst [vmem:[#allocation2 + $0x10] sm:$0xff] %v1102
        %1128 = vst [vmem:[#allocation2 + $0x18] sm:$0xff] %v1103
        %1129 = vst [vmem:[#allocation2 + $0x20] sm:$0xff] %v1104
        %1130 = vst [vmem:[#allocation2 + $0x28] sm:$0xff] %v1105
        %1131 = vst [vmem:[#allocation2 + $0x30] sm:$0xff] %v1106
        %1132 = vst [vmem:[#allocation2 + $0x38] sm:$0xff] %v1107
        %1133 = vst [vmem:[#allocation2 + $0x40] sm:$0xff] %v1108
        %1134 = vst [vmem:[#allocation2 + $0x48] sm:$0xff] %v1109
        %1135 = vst [vmem:[#allocation2 + $0x50] sm:$0xff] %v1110
        %1136 = vst [vmem:[#allocation2 + $0x58] sm:$0xff] %v1111
        %1137 = vst [vmem:[#allocation2 + $0x60] sm:$0xff] %v1112
        %1138 = vst [vmem:[#allocation2 + $0x68] sm:$0xff] %v1113
        %1139 = vst [vmem:[#allocation2 + $0x70] sm:$0xff] %v1114
        %1140 = vst [vmem:[#allocation2 + $0x78] sm:$0xff] %v1115
        %1141 = vst [vmem:[#allocation2 + $0x80] sm:$0xff] %v1116
        %1142 = vst [vmem:[#allocation2 + $0x88] sm:$0xff] %v1117
        %1143 = vst [vmem:[#allocation2 + $0x90] sm:$0xff] %v1118
        %1144 = vst [vmem:[#allocation2 + $0x98] sm:$0xff] %v1119
        %1145 = vst [vmem:[#allocation2 + $0xa0] sm:$0xff] %v1120
        %1146 = vst [vmem:[#allocation2 + $0xa8] sm:$0xff] %v1121
        %1147 = vst [vmem:[#allocation2 + $0xb0] sm:$0xff] %v1122
        %1148 = vst [vmem:[#allocation2 + $0xb8] sm:$0xff] %v1123
        %1149 = vst [vmem:[#allocation2 + $0xc0] sm:$0xff] %v1124
        %p1150 = scmp.eq.s32.totalorder %s22, 1
        // Predicated region
        $region37: #{tpu_custom_call.1} parent=27 // pred_check
          %p1151 = pneg %p1150
        $region38: #{tpu_custom_call.1} parent=27 // pred_check_branch
          %1153 = sbr.rel (%p1151) target = $region40
        $region39: #{tpu_custom_call.1} parent=27 // pred_region
          %v1154 = vld [vmem:[#allocation2] sm:$0xff]
          %v1155 = vld [vmem:[#allocation2 + $0x8] sm:$0xff]
          %v1156 = vld [vmem:[#allocation2 + $0x10] sm:$0xff]
          %v1157 = vld [vmem:[#allocation2 + $0x18] sm:$0xff]
          %v1158 = vld [vmem:[#allocation2 + $0x20] sm:$0xff]
          %v1159 = vld [vmem:[#allocation2 + $0x28] sm:$0xff]
          %v1160 = vld [vmem:[#allocation2 + $0x30] sm:$0xff]
          %v1161 = vld [vmem:[#allocation2 + $0x38] sm:$0xff]
          %v1162 = vld [vmem:[#allocation2 + $0x40] sm:$0xff]
          %v1163 = vld [vmem:[#allocation2 + $0x48] sm:$0xff]
          %v1164 = vld [vmem:[#allocation2 + $0x50] sm:$0xff]
          %v1165 = vld [vmem:[#allocation2 + $0x58] sm:$0xff]
          %v1166 = vld [vmem:[#allocation2 + $0x60] sm:$0xff]
          %v1167 = vld [vmem:[#allocation2 + $0x68] sm:$0xff]
          %v1168 = vld [vmem:[#allocation2 + $0x70] sm:$0xff]
          %v1169 = vld [vmem:[#allocation2 + $0x78] sm:$0xff]
          %v1170 = vld [vmem:[#allocation2 + $0x80] sm:$0xff]
          %v1171 = vld [vmem:[#allocation2 + $0x88] sm:$0xff]
          %v1172 = vld [vmem:[#allocation2 + $0x90] sm:$0xff]
          %v1173 = vld [vmem:[#allocation2 + $0x98] sm:$0xff]
          %v1174 = vld [vmem:[#allocation2 + $0xa0] sm:$0xff]
          %v1175 = vld [vmem:[#allocation2 + $0xa8] sm:$0xff]
          %v1176 = vld [vmem:[#allocation2 + $0xb0] sm:$0xff]
          %v1177 = vld [vmem:[#allocation2 + $0xb8] sm:$0xff]
          %v1178 = vld [vmem:[#allocation2 + $0xc0] sm:$0xff]
          %v1179 = vmul.f32 %v1154, 11.313708
          %v1180 = vmul.f32 %v1155, 11.313708
          %v1181 = vmul.f32 %v1156, 11.313708
          %v1182 = vmul.f32 %v1157, 11.313708
          %v1183 = vmul.f32 %v1158, 11.313708
          %v1184 = vmul.f32 %v1159, 11.313708
          %v1185 = vmul.f32 %v1160, 11.313708
          %v1186 = vmul.f32 %v1161, 11.313708
          %v1187 = vmul.f32 %v1162, 11.313708
          %v1188 = vmul.f32 %v1163, 11.313708
          %v1189 = vmul.f32 %v1164, 11.313708
          %v1190 = vmul.f32 %v1165, 11.313708
          %v1191 = vmul.f32 %v1166, 11.313708
          %v1192 = vmul.f32 %v1167, 11.313708
          %v1193 = vmul.f32 %v1168, 11.313708
          %v1194 = vmul.f32 %v1169, 11.313708
          %v1195 = vmul.f32 %v1170, 11.313708
          %v1196 = vmul.f32 %v1171, 11.313708
          %v1197 = vmul.f32 %v1172, 11.313708
          %v1198 = vmul.f32 %v1173, 11.313708
          %v1199 = vmul.f32 %v1174, 11.313708
          %v1200 = vmul.f32 %v1175, 11.313708
          %v1201 = vmul.f32 %v1176, 11.313708
          %v1202 = vmul.f32 %v1177, 11.313708
          %v1203 = vmul.f32 %v1178, 11.313708
          %1204 = vst [vmem:[#allocation6] sm:$0xff] %v1179
          %1205 = vst [vmem:[#allocation6 + $0x8] sm:$0xff] %v1180
          %1206 = vst [vmem:[#allocation6 + $0x10] sm:$0xff] %v1181
          %1207 = vst [vmem:[#allocation6 + $0x18] sm:$0xff] %v1182
          %1208 = vst [vmem:[#allocation6 + $0x20] sm:$0xff] %v1183
          %1209 = vst [vmem:[#allocation6 + $0x28] sm:$0xff] %v1184
          %1210 = vst [vmem:[#allocation6 + $0x30] sm:$0xff] %v1185
          %1211 = vst [vmem:[#allocation6 + $0x38] sm:$0xff] %v1186
          %1212 = vst [vmem:[#allocation6 + $0x40] sm:$0xff] %v1187
          %1213 = vst [vmem:[#allocation6 + $0x48] sm:$0xff] %v1188
          %1214 = vst [vmem:[#allocation6 + $0x50] sm:$0xff] %v1189
          %1215 = vst [vmem:[#allocation6 + $0x58] sm:$0xff] %v1190
          %1216 = vst [vmem:[#allocation6 + $0x60] sm:$0xff] %v1191
          %1217 = vst [vmem:[#allocation6 + $0x68] sm:$0xff] %v1192
          %1218 = vst [vmem:[#allocation6 + $0x70] sm:$0xff] %v1193
          %1219 = vst [vmem:[#allocation6 + $0x78] sm:$0xff] %v1194
          %1220 = vst [vmem:[#allocation6 + $0x80] sm:$0xff] %v1195
          %1221 = vst [vmem:[#allocation6 + $0x88] sm:$0xff] %v1196
          %1222 = vst [vmem:[#allocation6 + $0x90] sm:$0xff] %v1197
          %1223 = vst [vmem:[#allocation6 + $0x98] sm:$0xff] %v1198
          %1224 = vst [vmem:[#allocation6 + $0xa0] sm:$0xff] %v1199
          %1225 = vst [vmem:[#allocation6 + $0xa8] sm:$0xff] %v1200
          %1226 = vst [vmem:[#allocation6 + $0xb0] sm:$0xff] %v1201
          %1227 = vst [vmem:[#allocation6 + $0xb8] sm:$0xff] %v1202
          %1228 = vst [vmem:[#allocation6 + $0xc0] sm:$0xff] %v1203
        $region40: #{tpu_custom_call.1} parent=27 // pred_fallthru
          _
        // Predicated region
        $region41: #{tpu_custom_call.1} parent=27 // pred_check
          %p1229 = pneg %p99
        $region42: #{tpu_custom_call.1} parent=27 // pred_check_branch
          %1231 = sbr.rel (%p1229) target = $region44
        $region43: #{tpu_custom_call.1} parent=27 // pred_region
          %s1232 = smul.u32 25, %s21
          %s1234 = ssub.s32 3200, 3200
          %1235 = vsyncadd [#allocation5], %s1234
          %s1236 = smul.addr %s1232, 128
          %s1237 = scalar_lea.hbm %s2, %s1236
          %s1238 = sshll.u32 [#allocation6], 4
          %s1239 = int_to_ptr.vmem [resolvable:$true] %s1238
          %1244 = dma.vmem_to_hbm [thread:$0]  %s1239, 3200, %s1237, [#allocation5], 128, 128, 8
        $region44: #{tpu_custom_call.1} parent=27 // pred_fallthru
          _
        // Predicated region
        $region45: #{tpu_custom_call.1} parent=27 // pred_check
          %p1245 = pneg %p99
        $region46: #{tpu_custom_call.1} parent=27 // pred_check_branch
          %1247 = sbr.rel (%p1245) target = $region48
        $region47: #{tpu_custom_call.1} parent=27 // pred_region
          %1248 = dma.done [#allocation5], 3200
        $region48: #{tpu_custom_call.1} parent=27 // pred_fallthru
          _
      $region28: #{tpu_custom_call.1} parent=5 // pred_fallthru
        _
      %p1249 = scmp.le.s32.totalorder 2, %s12
      // Predicated region
      $region49: #{tpu_custom_call.1} parent=5 // pred_check
        %p1250 = pneg %p1249
      $region50: #{tpu_custom_call.1} parent=5 // pred_check_branch
        %1252 = sbr.rel (%p1250) target = $region52
      $region51: #{tpu_custom_call.1} parent=5 // pred_region
        %s1253 = ssub.s32 %s12, 2
      $region52: #{tpu_custom_call.1} parent=5 // pred_fallthru
        _
    $region6: #{tpu_custom_call.1} parent=1 // loop_footer
      %s16 = sadd.s32 1, %s12
    $region7: #{tpu_custom_call.1} parent=1 // loop_footer_branch
      %11 = sbr.rel target = $region3
    $region8: #{tpu_custom_call.1} parent=1 // loop_exit
      _
    %1254 = vsyncpa [#allocation4], 1
    %s1255 = scalar_lea.sflag [#allocation4], 1
    %1256 = vsyncpa %s1255, 1
    %1257 = vsyncpa [#allocation5], 1
    %s1258 = scalar_lea.sflag [#allocation5], 1
    %1259 = vsyncpa %s1258, 1

</llo_original>
